<compile_context>
chip_gen: v7x
topology: tpu7x:2x2x1
jax: 0.10.0
libtpu: 0.0.40
codegen_flags: <defaults>
</compile_context>

<pallas_src>
import jax
import jax.numpy as jnp
from jax.experimental import pallas as pl
from jax.experimental.pallas import tpu as pltpu


# ----------------------------------------------------------------------------
# Tiling helpers
# ----------------------------------------------------------------------------
def _round_up(x, m):
    return ((x + m - 1) // m) * m


def _choose_tile(dim, desired, align):
    """Tile size (multiple of `align`) and padded dim (multiple of the tile)."""
    if dim >= desired:
        tile = desired
    else:
        tile = _round_up(dim, align)
    return tile, _round_up(dim, tile)


# ----------------------------------------------------------------------------
# Pallas kernels
# ----------------------------------------------------------------------------
def _linear_kernel_single_k(x_ref, wt_ref, b_ref, o_ref):
    # x_ref: (tb, K), wt_ref: (K, tn), b_ref: (1, tn), o_ref: (tb, tn).
    acc = jnp.dot(x_ref[...], wt_ref[...], preferred_element_type=jnp.float32)
    o_ref[...] = (acc + b_ref[...].astype(jnp.float32)).astype(o_ref.dtype)


def _linear_kernel_multi_k(x_ref, wt_ref, b_ref, o_ref, acc_ref):
    # x_ref: (tb, tk), wt_ref: (tk, tn), b_ref: (1, tn),
    # o_ref: (tb, tn), acc_ref: (tb, tn) float32 scratch.
    k = pl.program_id(3)

    @pl.when(k == 0)
    def _init():
        acc_ref[...] = jnp.zeros_like(acc_ref)

    acc_ref[...] += jnp.dot(
        x_ref[...], wt_ref[...], preferred_element_type=jnp.float32
    )

    @pl.when(k == pl.num_programs(3) - 1)
    def _finalize():
        o_ref[...] = (acc_ref[...] + b_ref[...].astype(jnp.float32)).astype(
            o_ref.dtype
        )


def batched_linear_pallas(x, wt, b, *, block_rows=256, block_cols=256,
                          block_k=512):
    """y[e] = x[e] @ wt[e] + b[e] for every ensemble head e.

    x:  (E, B, F_in)
    wt: (E, F_in, F_out)   -- pre-transposed weight
    b:  (E, F_out)
    returns (E, B, F_out)
    """
    E, B, F_in = x.shape
    _, F_in_w, F_out = wt.shape
    assert F_in == F_in_w and b.shape == (E, F_out)

    tb, Bp = _choose_tile(B, block_rows, 8)        # batch tile (sublane axis)
    tn, Np = _choose_tile(F_out, block_cols, 128)  # out-feature tile (lane axis)
    tk, Kp = _choose_tile(F_in, block_k, 128)      # reduction tile

    # Zero-pad to tile multiples; zero padding contributes nothing to the dot.
    if (Bp, Kp) != (B, F_in):
        x = jnp.pad(x, ((0, 0), (0, Bp - B), (0, Kp - F_in)))
    if (Kp, Np) != (F_in, F_out):
        wt = jnp.pad(wt, ((0, 0), (0, Kp - F_in), (0, Np - F_out)))
    b3 = b.reshape(E, 1, F_out)
    if Np != F_out:
        b3 = jnp.pad(b3, ((0, 0), (0, 0), (0, Np - F_out)))

    num_k = Kp // tk
    in_item = jnp.dtype(x.dtype).itemsize

    if num_k == 1:
        # Whole reduction dim resident: lighter kernel (no scratch / pl.when).
        grid = (E, Bp // tb, Np // tn)
        footprint = (
            2 * (tb * Kp + Kp * tn + tn) * in_item  # inputs (double-buffered)
            + 2 * tb * tn * in_item                  # output (double-buffered)
        )
        vmem_limit = int(min(max(2 * footprint, 16 * 1024 * 1024),
                             48 * 1024 * 1024))
        out = pl.pallas_call(
            _linear_kernel_single_k,
            out_shape=jax.ShapeDtypeStruct((E, Bp, Np), x.dtype),
            grid_spec=pltpu.PrefetchScalarGridSpec(
                num_scalar_prefetch=0,
                grid=grid,
                in_specs=[
                    pl.BlockSpec((pl.Squeezed(), tb, Kp),
                                 lambda e, i, j: (e, i, 0)),
                    pl.BlockSpec((pl.Squeezed(), Kp, tn),
                                 lambda e, i, j: (e, 0, j)),
                    pl.BlockSpec((pl.Squeezed(), 1, tn),
                                 lambda e, i, j: (e, 0, j)),
                ],
                out_specs=pl.BlockSpec((pl.Squeezed(), tb, tn),
                                       lambda e, i, j: (e, i, j)),
            ),
            compiler_params=pltpu.CompilerParams(
                dimension_semantics=("parallel", "parallel", "parallel"),
                vmem_limit_bytes=vmem_limit,
            ),
        )(x, wt, b3)
    else:
        grid = (E, Bp // tb, Np // tn, num_k)
        footprint = (
            2 * (tb * tk + tk * tn + tn) * in_item  # inputs (double-buffered)
            + 2 * tb * tn * in_item                  # output (double-buffered)
            + tb * tn * 4                            # accumulator scratch
        )
        vmem_limit = int(min(max(2 * footprint, 16 * 1024 * 1024),
                             48 * 1024 * 1024))
        out = pl.pallas_call(
            _linear_kernel_multi_k,
            out_shape=jax.ShapeDtypeStruct((E, Bp, Np), x.dtype),
            grid_spec=pltpu.PrefetchScalarGridSpec(
                num_scalar_prefetch=0,
                grid=grid,
                in_specs=[
                    pl.BlockSpec((pl.Squeezed(), tb, tk),
                                 lambda e, i, j, k: (e, i, k)),
                    pl.BlockSpec((pl.Squeezed(), tk, tn),
                                 lambda e, i, j, k: (e, k, j)),
                    pl.BlockSpec((pl.Squeezed(), 1, tn),
                                 lambda e, i, j, k: (e, 0, j)),
                ],
                out_specs=pl.BlockSpec((pl.Squeezed(), tb, tn),
                                       lambda e, i, j, k: (e, i, j)),
                scratch_shapes=[pltpu.VMEM((tb, tn), jnp.float32)],
            ),
            compiler_params=pltpu.CompilerParams(
                dimension_semantics=("parallel", "parallel", "parallel",
                                     "arbitrary"),
                vmem_limit_bytes=vmem_limit,
            ),
        )(x, wt, b3)

    return out[:, :B, :F_out]


# ----------------------------------------------------------------------------
# cRT wrapper (mirrors the PyTorch module semantics).
# ----------------------------------------------------------------------------
class CRTPallas:
    def __init__(self, input_dim, output_dim, ensemble_name="none",
                 ensemble_num=None, key=None, dtype=jnp.float32):
        if key is None:
            key = jax.random.PRNGKey(0)
        self.ensemble_name = ensemble_name
        self.ensemble_num = ensemble_num

        def init_linear(k):
            # nn.Linear init: U(-1/sqrt(fan_in), 1/sqrt(fan_in)).
            kw, kb = jax.random.split(k)
            bound = 1.0 / float(input_dim) ** 0.5
            # Weight stored pre-transposed: (F_in, F_out) -> y = x @ wT + b.
            wT = jax.random.uniform(kw, (input_dim, output_dim), dtype,
                                    minval=-bound, maxval=bound)
            b = jax.random.uniform(kb, (output_dim,), dtype,
                                   minval=-bound, maxval=bound)
            return wT, b

        if ensemble_name == "none":
            wT, b = init_linear(key)
            self.wT = wT[None]          # (1, F_in, F_out)
            self.b = b[None]            # (1, F_out)
        elif ensemble_name == "tail":
            keys = jax.random.split(key, ensemble_num)
            ws, bs = zip(*(init_linear(k) for k in keys))
            self.wT = jnp.stack(ws)     # (E, F_in, F_out)
            self.b = jnp.stack(bs)      # (E, F_out)
        else:
            raise Exception(
                "Unsupported ensemble name, expect in ['none', 'tail']")
        # TODO(synk): fc_norm=True path (NormedLinear) is not defined in the
        # reference snippet; only the nn.Linear path is implemented.

    def __call__(self, x):
        if self.ensemble_name == "none":
            y = batched_linear_pallas(x[None], self.wT, self.b)
            return y[0]
        else:  # 'tail': list-in / list-out, fused into one pallas_call
            xs = jnp.stack(list(x))                     # (E, B, F_in)
            ys = batched_linear_pallas(xs, self.wT, self.b)
            return [ys[e] for e in range(ys.shape[0])]


# ----------------------------------------------------------------------------
# Demo / smoke test
# ----------------------------------------------------------------------------
if __name__ == "__main__":
    key = jax.random.PRNGKey(0)
    kx, kp, kp2, kx2 = jax.random.split(key, 4)

    B, F_in, F_out = 8, 32, 16
    x = jax.random.normal(kx, (B, F_in), jnp.float32)

    # 'none' path (default cRT config): plain Linear
    crt = CRTPallas(F_in, F_out, ensemble_name="none", key=kp)
    y = jax.block_until_ready(crt(x))
    y_ref = x @ crt.wT[0] + crt.b[0]
    assert y.shape == (B, F_out)
    assert jnp.allclose(y, y_ref, atol=1e-5, rtol=1e-5), "mismatch vs reference"

    # Ragged batch (exercises remainder / padding path)
    x_odd = jax.random.normal(kx2, (5, F_in), jnp.float32)
    y_odd = jax.block_until_ready(crt(x_odd))
    assert jnp.allclose(y_odd, x_odd @ crt.wT[0] + crt.b[0],
                        atol=1e-5, rtol=1e-5)

    # Larger shapes exercising the multi-k-tile accumulator path
    Bl, Fil, Fol = 300, 1024, 320
    xl = jax.random.normal(kx, (Bl, Fil), jnp.float32)
    crt_big = CRTPallas(Fil, Fol, ensemble_name="none", key=kp)
    yl = jax.block_until_ready(
        batched_linear_pallas(xl[None], crt_big.wT, crt_big.b,
                              block_k=512)[0])
    yl_ref = xl @ crt_big.wT[0] + crt_big.b[0]
    assert jnp.allclose(yl, yl_ref, atol=1e-3, rtol=1e-3)

    # 'tail' ensemble path: list-in / list-out, single fused pallas_call
    ens = 2
    xs = [x, x + 1.0]
    crt_tail = CRTPallas(F_in, F_out, ensemble_name="tail",
                         ensemble_num=ens, key=kp2)
    ys = jax.block_until_ready(crt_tail(xs))
    for e, (xi, yi) in enumerate(zip(xs, ys)):
        yi_ref = xi @ crt_tail.wT[e] + crt_tail.b[e]
        assert jnp.allclose(yi, yi_ref, atol=1e-5, rtol=1e-5)

    print("KERNEL_OK")
</pallas_src>

<mosaic_0001>
module attributes {stable_mosaic.version = 11 : i64} {
  func.func @_linear_kernel_single_k(%arg0: i32, %arg1: i32, %arg2: i32, %arg3: memref<1x8x128xf32, #tpu.memory_space<vmem>>, %arg4: memref<1x128x128xf32, #tpu.memory_space<vmem>>, %arg5: memref<1x1x128xf32, #tpu.memory_space<vmem>>, %arg6: memref<1x8x128xf32, #tpu.memory_space<vmem>>) attributes {dimension_semantics = [#tpu.dimension_semantics<parallel>, #tpu.dimension_semantics<parallel>, #tpu.dimension_semantics<parallel>], iteration_bounds = array<i64: 1, 1, 1>, scalar_prefetch = 0 : i64, scratch_operands = 0 : i64, tpu.core_type = #tpu.core_type<tc>, window_params = [{transform_indices = @transform_0, window_bounds = array<i64: 1, 8, 128>}, {transform_indices = @transform_1, window_bounds = array<i64: 1, 128, 128>}, {transform_indices = @transform_2, window_bounds = array<i64: 1, 1, 128>}, {transform_indices = @transform_3, window_bounds = array<i64: 1, 8, 128>}]} {
    %c0 = arith.constant 0 : index
    %c0_0 = arith.constant 0 : index
    %c0_1 = arith.constant 0 : index
    %0 = vector.load %arg3[%c0, %c0_0, %c0_1] : memref<1x8x128xf32, #tpu.memory_space<vmem>>, vector<1x8x128xf32>
    %1 = vector.shape_cast %0 : vector<1x8x128xf32> to vector<8x128xf32>
    %c0_2 = arith.constant 0 : index
    %c0_3 = arith.constant 0 : index
    %c0_4 = arith.constant 0 : index
    %2 = vector.load %arg4[%c0_2, %c0_3, %c0_4] : memref<1x128x128xf32, #tpu.memory_space<vmem>>, vector<1x128x128xf32>
    %3 = vector.shape_cast %2 : vector<1x128x128xf32> to vector<128x128xf32>
    %cst = arith.constant dense<0.000000e+00> : vector<8x128xf32>
    %4 = tpu.matmul %1, %3, %cst {dimension_numbers = #tpu.dot_dimension_numbers<[1], [0], [0], [1], [0, 0, 1, 1], [], []>} : vector<8x128xf32>, vector<128x128xf32>, vector<8x128xf32> -> vector<8x128xf32>
    %c0_5 = arith.constant 0 : index
    %c0_6 = arith.constant 0 : index
    %c0_7 = arith.constant 0 : index
    %5 = vector.load %arg5[%c0_5, %c0_6, %c0_7] : memref<1x1x128xf32, #tpu.memory_space<vmem>>, vector<1x1x128xf32>
    %6 = vector.shape_cast %5 : vector<1x1x128xf32> to vector<1x128xf32>
    %7 = vector.broadcast %6 : vector<1x128xf32> to vector<8x128xf32>
    %8 = arith.addf %4, %7 : vector<8x128xf32>
    %c0_8 = arith.constant 0 : index
    %c0_9 = arith.constant 0 : index
    %c0_10 = arith.constant 0 : index
    %9 = vector.load %arg6[%c0_8, %c0_9, %c0_10] : memref<1x8x128xf32, #tpu.memory_space<vmem>>, vector<1x8x128xf32>
    %10 = vector.shape_cast %9 : vector<1x8x128xf32> to vector<8x128xf32>
    %11 = vector.shape_cast %8 : vector<8x128xf32> to vector<1x8x128xf32>
    tpu.vector_store %arg6[%c0_8, %c0_9, %c0_10], %11 {strides = array<i32>} : memref<1x8x128xf32, #tpu.memory_space<vmem>>, vector<1x8x128xf32>,
    return
  }
  func.func @transform_0(%arg0: i32, %arg1: i32, %arg2: i32) -> (i32, i32, i32) {
    %c0_i32 = arith.constant 0 : i32
    %c0_i32_0 = arith.constant 0 : i32
    return %arg0, %arg1, %c0_i32 : i32, i32, i32
  }
  func.func @transform_1(%arg0: i32, %arg1: i32, %arg2: i32) -> (i32, i32, i32) {
    %c0_i32 = arith.constant 0 : i32
    %c0_i32_0 = arith.constant 0 : i32
    return %arg0, %c0_i32, %arg2 : i32, i32, i32
  }
  func.func @transform_2(%arg0: i32, %arg1: i32, %arg2: i32) -> (i32, i32, i32) {
    %c0_i32 = arith.constant 0 : i32
    %c0_i32_0 = arith.constant 0 : i32
    return %arg0, %c0_i32, %arg2 : i32, i32, i32
  }
  func.func @transform_3(%arg0: i32, %arg1: i32, %arg2: i32) -> (i32, i32, i32) {
    %c0_i32 = arith.constant 0 : i32
    return %arg0, %arg1, %arg2 : i32, i32, i32
  }
}

</mosaic_0001>

<llo_original>
// kernel: tpu_custom_call.1
$region0: #{tpu_custom_call.1}
  #allocation0 [shape = 'u32[]', space=smem, size = 0x4, offset = 0x4, fixed_abs, tag = 'smem constant byte address 0x4 - core index']
  #allocation1 [shape = 'u32[144,128]{1,0:T(1,128)}', space=vmem, size = 0x12000, scoped, tag = 'internal scratch']
  %s0 = inlined_call_operand.hbm [shape: f32[1,8,128], index: 0, kind: input, shape index: {}]
  %s1 = inlined_call_operand.hbm [shape: f32[1,128,128], index: 1, kind: input, shape index: {}]
  %s2 = inlined_call_operand.vmem [shape: f32[1,1,128], index: 2, kind: input, shape index: {}]
  %s3 = inlined_call_operand.hbm [shape: f32[1,8,128], index: 3, kind: output, shape index: {}]
  %s4 = sld [smem:[#allocation0]]
  $region30: #{tpu_custom_call.1} parent=0
    _
  %s6 = ssub.s32 1, %s4
  %s7 = scalar_select 0, %s6, %s4
  $region1: #{tpu_custom_call.1} parent=0
    #allocation2 [shape = 'u8[4096]{0}', space=vmem, size = 0x1000, scoped, tag = 'input window, operand 0, single buffered']
    #allocation3 [shape = 's32[1]{0}', space=sflag, size = 0x4, scoped, tag = 'scoped memory for tpu_custom_call.1']
    #allocation4 [shape = 's32[1]{0}', space=sflag, size = 0x4, scoped, tag = 'scoped memory for tpu_custom_call.1']
    #allocation5 [shape = 'u8[65536]{0}', space=vmem, size = 0x10000, scoped, tag = 'input window, operand 1, single buffered']
    #allocation6 [shape = 's32[1]{0}', space=sflag, size = 0x4, scoped, tag = 'scoped memory for tpu_custom_call.1']
    #allocation7 [shape = 'u8[4096]{0}', space=vmem, size = 0x1000, scoped, tag = 'output window, operand 0, single buffered']
    %8 = vsyncpa [#allocation3], 0
    %9 = vsyncpa [#allocation6], 0
    %10 = vsyncpa [#allocation4], 0
    // Predicated region
    $region2: #{tpu_custom_call.1} parent=1 // pred_check
      _
    $region3: #{tpu_custom_call.1} parent=1 // pred_check_branch
      %12 = sbr.rel (0) target = $region5
    $region4: #{tpu_custom_call.1} parent=1 // pred_region
      %s14 = ssub.s32 128, 128
      %15 = vsyncadd [#allocation3], %s14
      %s17 = sshll.u32 [#allocation2], 4
      %s18 = int_to_ptr.vmem [resolvable:$true] %s17
      %20 = dma.hbm_to_vmem [thread:$0]  %s0, 128, %s18, [#allocation3]
    $region5: #{tpu_custom_call.1} parent=1 // pred_fallthru
      _
    // Predicated region
    $region6: #{tpu_custom_call.1} parent=1 // pred_check
      _
    $region7: #{tpu_custom_call.1} parent=1 // pred_check_branch
      %22 = sbr.rel (0) target = $region9
    $region8: #{tpu_custom_call.1} parent=1 // pred_region
      %s24 = ssub.s32 2048, 2048
      %25 = vsyncadd [#allocation6], %s24
      %s26 = sshll.u32 [#allocation5], 4
      %s27 = int_to_ptr.vmem [resolvable:$true] %s26
      %32 = dma.hbm_to_vmem [thread:$0]  %s1, 2048, %s27, [#allocation6], 128, 128, 8
    $region9: #{tpu_custom_call.1} parent=1 // pred_fallthru
      _
    // Predicated region
    $region10: #{tpu_custom_call.1} parent=1 // pred_check
      _
    $region11: #{tpu_custom_call.1} parent=1 // pred_check_branch
      %34 = sbr.rel (0) target = $region13
    $region12: #{tpu_custom_call.1} parent=1 // pred_region
      _
    $region13: #{tpu_custom_call.1} parent=1 // pred_fallthru
      _
    // Predicated region
    $region14: #{tpu_custom_call.1} parent=1 // pred_check
      _
    $region15: #{tpu_custom_call.1} parent=1 // pred_check_branch
      %36 = sbr.rel (0) target = $region17
    $region16: #{tpu_custom_call.1} parent=1 // pred_region
      %37 = dma.done [#allocation3], 128
    $region17: #{tpu_custom_call.1} parent=1 // pred_fallthru
      _
    // Predicated region
    $region18: #{tpu_custom_call.1} parent=1 // pred_check
      _
    $region19: #{tpu_custom_call.1} parent=1 // pred_check_branch
      %39 = sbr.rel (0) target = $region21
    $region20: #{tpu_custom_call.1} parent=1 // pred_region
      %40 = dma.done [#allocation6], 2048
    $region21: #{tpu_custom_call.1} parent=1 // pred_fallthru
      _
    %v41 = vld [vmem:[#allocation2] sm:$0xff]
    %v42 = vld [vmem:[#allocation5] sm:$0xff]
    %v43 = vld [vmem:[#allocation5 + $0x8] sm:$0xff]
    %v44 = vld [vmem:[#allocation5 + $0x10] sm:$0xff]
    %v45 = vld [vmem:[#allocation5 + $0x18] sm:$0xff]
    %v46 = vld [vmem:[#allocation5 + $0x20] sm:$0xff]
    %v47 = vld [vmem:[#allocation5 + $0x28] sm:$0xff]
    %v48 = vld [vmem:[#allocation5 + $0x30] sm:$0xff]
    %v49 = vld [vmem:[#allocation5 + $0x38] sm:$0xff]
    %v50 = vld [vmem:[#allocation5 + $0x40] sm:$0xff]
    %v51 = vld [vmem:[#allocation5 + $0x48] sm:$0xff]
    %v52 = vld [vmem:[#allocation5 + $0x50] sm:$0xff]
    %v53 = vld [vmem:[#allocation5 + $0x58] sm:$0xff]
    %v54 = vld [vmem:[#allocation5 + $0x60] sm:$0xff]
    %v55 = vld [vmem:[#allocation5 + $0x68] sm:$0xff]
    %v56 = vld [vmem:[#allocation5 + $0x70] sm:$0xff]
    %v57 = vld [vmem:[#allocation5 + $0x78] sm:$0xff]
    %v58 = vld [vmem:[%s2] sm:$0x1]
    %v60 = vlaneseq
    %v61 = vshrl.u32 %v60, 7
    %v62 = vsub.s32 0, %v61
    %v63 = vrot.slane %v58, %v62
    %65 = vmatprep.subr.mxu0 0.0
    %66 = vmatpush1.msra.mxu0 %v42
    %67 = vmatprep.subr.mxu0 0.0
    %68 = vmatpush1.msra.mxu0 %v43
    %69 = vmatprep.subr.mxu0 0.0
    %70 = vmatpush1.msra.mxu0 %v44
    %71 = vmatprep.subr.mxu0 0.0
    %72 = vmatpush1.msra.mxu0 %v45
    %73 = vmatprep.subr.mxu0 0.0
    %74 = vmatpush1.msra.mxu0 %v46
    %75 = vmatprep.subr.mxu0 0.0
    %76 = vmatpush1.msra.mxu0 %v47
    %77 = vmatprep.subr.mxu0 0.0
    %78 = vmatpush1.msra.mxu0 %v48
    %79 = vmatprep.subr.mxu0 0.0
    %80 = vmatpush1.msra.mxu0 %v49
    %81 = vmatprep.subr.mxu0 0.0
    %82 = vmatpush1.msra.mxu0 %v50
    %83 = vmatprep.subr.mxu0 0.0
    %84 = vmatpush1.msra.mxu0 %v51
    %85 = vmatprep.subr.mxu0 0.0
    %86 = vmatpush1.msra.mxu0 %v52
    %87 = vmatprep.subr.mxu0 0.0
    %88 = vmatpush1.msra.mxu0 %v53
    %89 = vmatprep.subr.mxu0 0.0
    %90 = vmatpush1.msra.mxu0 %v54
    %91 = vmatprep.subr.mxu0 0.0
    %92 = vmatpush1.msra.mxu0 %v55
    %93 = vmatprep.subr.mxu0 0.0
    %94 = vmatpush1.msra.mxu0 %v56
    %95 = vmatprep.subr.mxu0 0.0
    %96 = vmatpush1.msra.mxu0 %v57
    %97 = vmatprep.subr.mxu0 0.0
    %98 = vmatpush1.msra.mxu0 0.0
    %99 = vmatprep.subr.mxu0 0.0
    %100 = vmatpush1.msra.mxu0 0.0
    %101 = vmatprep.subr.mxu0 0.0
    %102 = vmatpush1.msra.mxu0 0.0
    %103 = vmatprep.subr.mxu0 0.0
    %104 = vmatpush1.msra.mxu0 0.0
    %105 = vmatprep.subr.mxu0 0.0
    %106 = vmatpush1.msra.mxu0 0.0
    %107 = vmatprep.subr.mxu0 0.0
    %108 = vmatpush1.msra.mxu0 0.0
    %109 = vmatprep.subr.mxu0 0.0
    %110 = vmatpush1.msra.mxu0 0.0
    %111 = vmatprep.subr.mxu0 0.0
    %112 = vmatpush1.msra.mxu0 0.0
    %113 = vmatprep.subr.mxu0 0.0
    %114 = vmatpush1.msra.mxu0 0.0
    %115 = vmatprep.subr.mxu0 0.0
    %116 = vmatpush1.msra.mxu0 0.0
    %117 = vmatprep.subr.mxu0 0.0
    %118 = vmatpush1.msra.mxu0 0.0
    %119 = vmatprep.subr.mxu0 0.0
    %120 = vmatpush1.msra.mxu0 0.0
    %121 = vmatprep.subr.mxu0 0.0
    %122 = vmatpush1.msra.mxu0 0.0
    %123 = vmatprep.subr.mxu0 0.0
    %124 = vmatpush1.msra.mxu0 0.0
    %125 = vmatprep.subr.mxu0 0.0
    %126 = vmatpush1.msra.mxu0 0.0
    %127 = vmatprep.subr.mxu0 0.0
    %128 = vmatpush1.msra.mxu0 0.0
    %129 = vmatprep.mubr.f32.mxu0 0.0
    %130 = vmatmul.mubr.f32.gmra.mrb[0].mxu0 %v41
    %v131 = vpop.f32.mrb[0].mxu0
    %v132 = vadd.f32 %v63, %v131
    %v133 = vpop.f32.mrb[0].mxu0
    %134 = vdwg.mxu0
    %135 = vst [vmem:[#allocation7] sm:$0xff] %v132
    // Predicated region
    $region22: #{tpu_custom_call.1} parent=1 // pred_check
      _
    $region23: #{tpu_custom_call.1} parent=1 // pred_check_branch
      %137 = sbr.rel (0) target = $region25
    $region24: #{tpu_custom_call.1} parent=1 // pred_region
      %s139 = ssub.s32 128, 128
      %140 = vsyncadd [#allocation4], %s139
      %s142 = sshll.u32 [#allocation7], 4
      %s143 = int_to_ptr.vmem [resolvable:$true] %s142
      %145 = dma.vmem_to_hbm [thread:$0]  %s143, 128, %s3, [#allocation4]
    $region25: #{tpu_custom_call.1} parent=1 // pred_fallthru
      _
    // Predicated region
    $region26: #{tpu_custom_call.1} parent=1 // pred_check
      _
    $region27: #{tpu_custom_call.1} parent=1 // pred_check_branch
      %147 = sbr.rel (0) target = $region29
    $region28: #{tpu_custom_call.1} parent=1 // pred_region
      %148 = dma.done [#allocation4], 128
    $region29: #{tpu_custom_call.1} parent=1 // pred_fallthru
      _
    %149 = vsyncpa [#allocation3], 1
    %150 = vsyncpa [#allocation6], 1
    %151 = vsyncpa [#allocation4], 1

</llo_original>
